<compile_context>
chip_gen: v6e
topology: v6e:2x2x1
jax: 0.10.0
libtpu: 0.0.40
codegen_flags: <defaults>
</compile_context>

<pallas_src>
import functools
import math

import jax
import jax.numpy as jnp
from jax.experimental import pallas as pl
from jax.experimental.pallas import tpu as pltpu


def _eca_kernel(w_ref, x_ref, o_ref, *, k, true_hw):
    """One (TB, C, HWp) tile per grid step.

    w_ref : SMEM (k,) f32    conv1d taps (scalar-prefetched)
    x_ref : VMEM (TB, C, HWp) input tile  (HWp lane-padded with zeros)
    o_ref : VMEM (TB, C, HWp) output tile
    """
    pad = (k - 1) // 2
    x = x_ref[...]                                   # (TB, C, HWp), native dtype
    tb, C, _ = x.shape

    # 1) Global average pooling over the (padded) spatial lane axis.
    #    Padded lanes are zero, so dividing by the true H*W is exact.
    pooled = jnp.sum(x, axis=-1, keepdims=True, dtype=jnp.float32)   # (TB, C, 1)
    pooled = pooled * jnp.float32(1.0 / true_hw)

    # 2) 1-D cross-channel conv as k shifted scalar FMAs (zero-padded
    #    cross-correlation): conv[b, c] = sum_j w[j] * pooled[b, c + j - pad].
    def shift_channels(v, off):
        if off == 0:
            return v
        if off > 0:
            return jnp.concatenate(
                [v[:, off:, :], jnp.zeros((tb, off, 1), v.dtype)], axis=1)
        return jnp.concatenate(
            [jnp.zeros((tb, -off, 1), v.dtype), v[:, :C + off, :]], axis=1)

    conv = jnp.zeros_like(pooled)
    for j in range(k):                                # k is tiny & static
        conv = conv + w_ref[j] * shift_channels(pooled, j - pad)

    # 3) Sigmoid -> channel attention weights (kept per-channel, lane width 1).
    attn = jax.nn.sigmoid(conv).astype(x.dtype)       # (TB, C, 1)

    # 4) Feature recalibration, broadcast over the spatial lane axis.
    o_ref[...] = x * attn


def eca_forward(x, w):
    """x: (B, C, H, W), w: (k,) f32 conv taps. Returns (B, C, H, W)."""
    B, C, H, W = x.shape
    k = int(w.shape[0])
    HW = H * W
    itemsize = jnp.dtype(x.dtype).itemsize

    # Lane-dense spatial axis: pad H*W up to a multiple of 128.
    HWp = ((HW + 127) // 128) * 128
    x_r = x.reshape(B, C, HW)
    if HWp != HW:
        x_r = jnp.pad(x_r, ((0, 0), (0, 0), (0, HWp - HW)))

    # Batch several images per grid step so each tile is ~a few MiB
    # (amortizes the ~0.35us/step pipeline overhead on small images).
    img_bytes = C * HWp * itemsize
    target_tile_bytes = 4 << 20
    tb = max(1, min(B, target_tile_bytes // max(1, img_bytes)))

    # Pad batch so TB divides it (padded images are sliced off afterwards).
    Bp = ((B + tb - 1) // tb) * tb
    if Bp != B:
        x_r = jnp.pad(x_r, ((0, Bp - B), (0, 0), (0, 0)))

    # Double-buffered input + output tiles, plus headroom; stay below v7x's
    # 64 MiB physical VMEM.
    tile_bytes = tb * img_bytes
    vmem_need = 4 * tile_bytes + (2 << 20)
    vmem_limit = int(min(max(vmem_need, 32 << 20), 60 << 20))
    # TODO(synk): for huge single images (4*C*HW*itemsize > ~60 MiB, v7x) tile
    # the HW axis with a two-phase partial-sum / apply grid instead.

    kernel = functools.partial(_eca_kernel, k=k, true_hw=HW)

    out = pl.pallas_call(
        kernel,
        out_shape=jax.ShapeDtypeStruct((Bp, C, HWp), x.dtype),
        grid_spec=pltpu.PrefetchScalarGridSpec(
            num_scalar_prefetch=1,
            grid=(Bp // tb,),
            in_specs=[pl.BlockSpec((tb, C, HWp), lambda b, w_ref: (b, 0, 0))],
            out_specs=pl.BlockSpec((tb, C, HWp), lambda b, w_ref: (b, 0, 0)),
        ),
        compiler_params=pltpu.CompilerParams(
            dimension_semantics=("parallel",),
            vmem_limit_bytes=vmem_limit),
        cost_estimate=pl.CostEstimate(
            flops=2 * B * C * HW + 2 * B * C * k,
            transcendentals=B * C,
            bytes_accessed=2 * B * C * HW * itemsize),
    )(w.astype(jnp.float32), x_r)

    out = out[:B, :, :HW]
    return out.reshape(B, C, H, W)


def eca_reference(x, w):
    """Pure-JAX reference matching the PyTorch forward."""
    B, C, H, W = x.shape
    k = w.shape[0]
    pad = (k - 1) // 2
    pooled = jnp.mean(x, axis=(2, 3))                       # (B, C)
    padded = jnp.pad(pooled, ((0, 0), (pad, pad)))          # (B, C + 2*pad)
    conv = jnp.zeros_like(pooled)
    for j in range(k):
        conv = conv + w[j] * padded[:, j:j + C]
    attn = jax.nn.sigmoid(conv)                             # (B, C)
    return x * attn[:, :, None, None]


def eca_kernel_size(channels, gamma=2, beta=1):
    ks = int(abs(math.log2(channels) / gamma + beta / gamma))
    return ks if ks % 2 else ks + 1


if __name__ == "__main__":
    B, C, H, W = 2, 16, 16, 16
    gamma, beta = 2, 1
    k = eca_kernel_size(C, gamma, beta)          # -> 3 for C=16

    key = jax.random.PRNGKey(0)
    kx, kw = jax.random.split(key)
    x = jax.random.normal(kx, (B, C, H, W), dtype=jnp.float32)

    # Deterministic Xavier-normal init for Conv1d weight of shape (1, 1, k):
    # fan_in = fan_out = k  ->  std = sqrt(2 / (2k))
    std = math.sqrt(2.0 / (2.0 * k))
    w = jax.random.normal(kw, (k,), dtype=jnp.float32) * std

    y = eca_forward(x, w)
    y = jax.block_until_ready(y)

    y_ref = eca_reference(x, w)
    assert y.shape == x.shape
    assert jnp.allclose(y, y_ref, atol=1e-5, rtol=1e-5), "mismatch vs reference"

    print("KERNEL_OK")
</pallas_src>

<mosaic_0001>
module attributes {stable_mosaic.version = 11 : i64} {
  func.func @_eca_kernel(%arg0: i32, %arg1: memref<3xf32, #tpu.memory_space<smem>>, %arg2: memref<2x16x256xf32, #tpu.memory_space<vmem>>, %arg3: memref<2x16x256xf32, #tpu.memory_space<vmem>>) attributes {dimension_semantics = [#tpu.dimension_semantics<parallel>], iteration_bounds = array<i64: 1>, scalar_prefetch = 1 : i64, scratch_operands = 0 : i64, tpu.core_type = #tpu.core_type<tc>, window_params = [{transform_indices = @transform_0, window_bounds = array<i64: 2, 16, 256>}, {transform_indices = @transform_1, window_bounds = array<i64: 2, 16, 256>}]} {
    %c0 = arith.constant 0 : index
    %c0_0 = arith.constant 0 : index
    %c0_1 = arith.constant 0 : index
    %0 = vector.load %arg2[%c0, %c0_0, %c0_1] : memref<2x16x256xf32, #tpu.memory_space<vmem>>, vector<2x16x256xf32>
    %cst = arith.constant dense<0.000000e+00> : vector<2x16xf32>
    %1 = vector.multi_reduction <add>, %0, %cst [2] : vector<2x16x256xf32> to vector<2x16xf32>
    %2 = vector.shape_cast %1 : vector<2x16xf32> to vector<2x16x1xf32>
    %cst_2 = arith.constant 3.906250e-03 : f32
    %3 = vector.broadcast %cst_2 : f32 to vector<2x16x1xf32>
    %4 = arith.mulf %2, %3 : vector<2x16x1xf32>
    %cst_3 = arith.constant 0.000000e+00 : f32
    %5 = vector.broadcast %cst_3 : f32 to vector<2x16x1xf32>
    %c0_4 = arith.constant 0 : index
    %6 = memref.load %arg1[%c0_4] : memref<3xf32, #tpu.memory_space<smem>>
    %cst_5 = arith.constant 0.000000e+00 : f32
    %7 = vector.broadcast %cst_5 : f32 to vector<2x1x1xf32>
    %8 = vector.extract_strided_slice %4 {offsets = [0, 0, 0], sizes = [2, 15, 1], strides = [1, 1, 1]} : vector<2x16x1xf32> to vector<2x15x1xf32>
    %9 = tpu.concatenate %7, %8 in 1 : vector<2x1x1xf32>, vector<2x15x1xf32> -> vector<2x16x1xf32>
    %10 = vector.broadcast %6 : f32 to vector<2x16x1xf32>
    %11 = arith.mulf %10, %9 : vector<2x16x1xf32>
    %12 = arith.addf %5, %11 : vector<2x16x1xf32>
    %c1 = arith.constant 1 : index
    %13 = memref.load %arg1[%c1] : memref<3xf32, #tpu.memory_space<smem>>
    %14 = vector.broadcast %13 : f32 to vector<2x16x1xf32>
    %15 = arith.mulf %14, %4 : vector<2x16x1xf32>
    %16 = arith.addf %12, %15 : vector<2x16x1xf32>
    %c2 = arith.constant 2 : index
    %17 = memref.load %arg1[%c2] : memref<3xf32, #tpu.memory_space<smem>>
    %18 = vector.extract_strided_slice %4 {offsets = [0, 1, 0], sizes = [2, 15, 1], strides = [1, 1, 1]} : vector<2x16x1xf32> to vector<2x15x1xf32>
    %cst_6 = arith.constant 0.000000e+00 : f32
    %19 = vector.broadcast %cst_6 : f32 to vector<2x1x1xf32>
    %20 = tpu.concatenate %18, %19 in 1 : vector<2x15x1xf32>, vector<2x1x1xf32> -> vector<2x16x1xf32>
    %21 = vector.broadcast %17 : f32 to vector<2x16x1xf32>
    %22 = arith.mulf %21, %20 : vector<2x16x1xf32>
    %23 = arith.addf %16, %22 : vector<2x16x1xf32>
    %24 = arith.negf %23 : vector<2x16x1xf32>
    %25 = math.exp %24 : vector<2x16x1xf32>
    %cst_7 = arith.constant 1.000000e+00 : f32
    %26 = vector.broadcast %cst_7 : f32 to vector<2x16x1xf32>
    %27 = arith.addf %26, %25 : vector<2x16x1xf32>
    %28 = arith.divf %26, %27 : vector<2x16x1xf32>
    %29 = vector.broadcast %28 : vector<2x16x1xf32> to vector<2x16x256xf32>
    %30 = arith.mulf %0, %29 : vector<2x16x256xf32>
    %c0_8 = arith.constant 0 : index
    %c0_9 = arith.constant 0 : index
    %c0_10 = arith.constant 0 : index
    %31 = vector.load %arg3[%c0_8, %c0_9, %c0_10] : memref<2x16x256xf32, #tpu.memory_space<vmem>>, vector<2x16x256xf32>
    tpu.vector_store %arg3[%c0_8, %c0_9, %c0_10], %30 {strides = array<i32>} : memref<2x16x256xf32, #tpu.memory_space<vmem>>, vector<2x16x256xf32>,
    return
  }
  func.func @transform_0(%arg0: i32, %arg1: memref<3xf32, #tpu.memory_space<smem>>) -> (i32, i32, i32) {
    %c0_i32 = arith.constant 0 : i32
    %c0_i32_0 = arith.constant 0 : i32
    %c0_i32_1 = arith.constant 0 : i32
    return %arg0, %c0_i32, %c0_i32_0 : i32, i32, i32
  }
  func.func @transform_1(%arg0: i32, %arg1: memref<3xf32, #tpu.memory_space<smem>>) -> (i32, i32, i32) {
    %c0_i32 = arith.constant 0 : i32
    %c0_i32_0 = arith.constant 0 : i32
    %c0_i32_1 = arith.constant 0 : i32
    return %arg0, %c0_i32, %c0_i32_0 : i32, i32, i32
  }
}

</mosaic_0001>

<llo_original>
// kernel: tpu_custom_call.1
$region0: #{tpu_custom_call.1}
  #allocation0 [shape = 'u32[]', space=smem, size = 0x4, offset = 0x4, fixed_abs, tag = 'smem constant byte address 0x4 - core index']
  #allocation1 [shape = 'u32[144,128]{1,0:T(1,128)}', space=vmem, size = 0x12000, scoped, tag = 'internal scratch']
  #allocation2 [shape = 's32[1]{0}', space=sflag, size = 0x4, scoped, tag = 'scoped memory for tpu_custom_call.1']
  #allocation3 [shape = 'u8[512]{0}', space=smem, size = 0x200, scoped, tag = 'prefetched SMEM operand 0']
  %s0 = inlined_call_operand.hbm [shape: f32[3], index: 0, kind: input, shape index: {}]
  %s1 = inlined_call_operand.hbm [shape: f32[2,16,256], index: 1, kind: input, shape index: {}]
  %s2 = inlined_call_operand.hbm [shape: f32[2,16,256], index: 2, kind: output, shape index: {}]
  %s3 = sld [smem:[#allocation0]]
  $region18: #{tpu_custom_call.1} parent=0
    _
  %s5 = ssub.s32 1, %s3
  %s6 = scalar_select 0, %s5, %s3
  %8 = dma.hbm_to_smem %s0, 16, [#allocation3], [#allocation2]
  %9 = dma.done [#allocation2], 16
  %10 = sfence
  $region1: #{tpu_custom_call.1} parent=0
    #allocation4 [shape = 'u8[32768]{0}', space=vmem, size = 0x8000, scoped, tag = 'input window, operand 1, single buffered']
    #allocation5 [shape = 's32[1]{0}', space=sflag, size = 0x4, scoped, tag = 'scoped memory for tpu_custom_call.1']
    #allocation6 [shape = 's32[1]{0}', space=sflag, size = 0x4, scoped, tag = 'scoped memory for tpu_custom_call.1']
    #allocation7 [shape = 'u8[32768]{0}', space=vmem, size = 0x8000, scoped, tag = 'output window, operand 0, single buffered']
    %11 = vsyncpa [#allocation5], 0
    %12 = vsyncpa [#allocation6], 0
    // Predicated region
    $region2: #{tpu_custom_call.1} parent=1 // pred_check
      _
    $region3: #{tpu_custom_call.1} parent=1 // pred_check_branch
      %14 = sbr.rel (0) target = $region5
    $region4: #{tpu_custom_call.1} parent=1 // pred_region
      %s16 = ssub.s32 1024, 1024
      %17 = vsyncadd [#allocation5], %s16
      %s18 = sshll.u32 [#allocation4], 4
      %s19 = int_to_ptr.vmem [resolvable:$true] %s18
      %24 = dma.hbm_to_vmem [thread:$0]  %s1, 1024, %s19, [#allocation5], 256, 256, 16
    $region5: #{tpu_custom_call.1} parent=1 // pred_fallthru
      _
    // Predicated region
    $region6: #{tpu_custom_call.1} parent=1 // pred_check
      _
    $region7: #{tpu_custom_call.1} parent=1 // pred_check_branch
      %26 = sbr.rel (0) target = $region9
    $region8: #{tpu_custom_call.1} parent=1 // pred_region
      %27 = dma.done [#allocation5], 1024
    $region9: #{tpu_custom_call.1} parent=1 // pred_fallthru
      _
    %v28 = vld [vmem:[#allocation4] sm:$0xff]
    %v29 = vld [vmem:[#allocation4 + $0x8] sm:$0xff]
    %v30 = vld [vmem:[#allocation4 + $0x10] sm:$0xff]
    %v31 = vld [vmem:[#allocation4 + $0x18] sm:$0xff]
    %v32 = vld [vmem:[#allocation4 + $0x20] sm:$0xff]
    %v33 = vld [vmem:[#allocation4 + $0x28] sm:$0xff]
    %v34 = vld [vmem:[#allocation4 + $0x30] sm:$0xff]
    %v35 = vld [vmem:[#allocation4 + $0x38] sm:$0xff]
    %v36 = vadd.f32 %v28, %v29
    %37 = vadd.xlane.f32.xlu0 %v36
    %v38 = vpop.xlane.xlu0 %37
    %v39 = vadd.f32 %v30, %v31
    %40 = vadd.xlane.f32.xlu0 %v39
    %v41 = vpop.xlane.xlu0 %40
    %v42 = vadd.f32 %v32, %v33
    %43 = vadd.xlane.f32.xlu0 %v42
    %v44 = vpop.xlane.xlu0 %43
    %v45 = vadd.f32 %v34, %v35
    %46 = vadd.xlane.f32.xlu0 %v45
    %v47 = vpop.xlane.xlu0 %46
    %v48 = vmul.f32 %v38, 0.00390625
    %v49 = vmul.f32 %v41, 0.00390625
    %v50 = vmul.f32 %v44, 0.00390625
    %v51 = vmul.f32 %v47, 0.00390625
    %s52 = sld [smem:[#allocation3]]
    %vm57 = vcmask 1040384
    %v58 = vrot.slane %v48, 7
    %v59 = vrot.slane %v49, 7
    %v60 = vsel %vm57, %v58, %v59
    %v61 = vrot.slane %v50, 7
    %v62 = vrot.slane %v51, 7
    %v63 = vsel %vm57, %v61, %v62
    %v68 = vsel %vm57, 0.0, %v58
    %v69 = vsel %vm57, 0.0, %v61
    %v70 = vstv %s52
    %v71 = vmul.f32 %v70, %v68
    %v72 = vmul.f32 %v70, %v60
    %v73 = vmul.f32 %v70, %v69
    %v74 = vmul.f32 %v70, %v63
    %v75 = vadd.f32 %v71, 0.0
    %v76 = vadd.f32 %v72, 0.0
    %v77 = vadd.f32 %v73, 0.0
    %v78 = vadd.f32 %v74, 0.0
    %s79 = sld [smem:[#allocation3 + $0x1]]
    %v80 = vstv %s79
    %v81 = vmul.f32 %v80, %v48
    %v82 = vmul.f32 %v80, %v49
    %v83 = vmul.f32 %v80, %v50
    %v84 = vmul.f32 %v80, %v51
    %v85 = vadd.f32 %v75, %v81
    %v86 = vadd.f32 %v76, %v82
    %v87 = vadd.f32 %v77, %v83
    %v88 = vadd.f32 %v78, %v84
    %s89 = sld [smem:[#allocation3 + $0x2]]
    %vm90 = vcmask 1046528
    %v91 = vrot.slane %v48, 1
    %v92 = vrot.slane %v49, 1
    %v93 = vsel %vm90, %v91, %v92
    %v94 = vrot.slane %v50, 1
    %v95 = vrot.slane %v51, 1
    %v96 = vsel %vm90, %v94, %v95
    %v101 = vsel %vm90, %v92, 0.0
    %v102 = vsel %vm90, %v95, 0.0
    %v103 = vstv %s89
    %v104 = vmul.f32 %v103, %v93
    %v105 = vmul.f32 %v103, %v101
    %v106 = vmul.f32 %v103, %v96
    %v107 = vmul.f32 %v103, %v102
    %v108 = vadd.f32 %v85, %v104
    %v109 = vadd.f32 %v86, %v105
    %v110 = vadd.f32 %v87, %v106
    %v111 = vadd.f32 %v88, %v107
    %v112 = vxor.u32 %v108, 2147483648
    %v113 = vxor.u32 %v109, 2147483648
    %v114 = vxor.u32 %v110, 2147483648
    %v115 = vxor.u32 %v111, 2147483648
    %v116 = vmul.f32 %v112, 1.442695
    %v117 = vpow.pop %v116
    %v118 = vmul.f32 %v113, 1.442695
    %v119 = vpow.pop %v118
    %v120 = vmul.f32 %v114, 1.442695
    %v121 = vpow.pop %v120
    %v122 = vmul.f32 %v115, 1.442695
    %v123 = vpow.pop %v122
    %v124 = vadd.f32 %v117, 1.0
    %v125 = vadd.f32 %v119, 1.0
    %v126 = vadd.f32 %v121, 1.0
    %v127 = vadd.f32 %v123, 1.0
    %v128 = vrcp.pop %v124
    %v129 = vmul.f32 1.0, %v128
    %v130 = vrcp.pop %v125
    %v131 = vmul.f32 1.0, %v130
    %v132 = vrcp.pop %v126
    %v133 = vmul.f32 1.0, %v132
    %v134 = vrcp.pop %v127
    %v135 = vmul.f32 1.0, %v134
    %137 = vset.pattern.permute.xlu0 0
    %138 = vperm.xlu0 %137, %v129
    %v139 = vpop.permute.xlu0 %138
    %142 = vset.pattern.permute.xlu0 0
    %143 = vperm.xlu0 %142, %v131
    %v144 = vpop.permute.xlu0 %143
    %147 = vset.pattern.permute.xlu0 0
    %148 = vperm.xlu0 %147, %v133
    %v149 = vpop.permute.xlu0 %148
    %152 = vset.pattern.permute.xlu0 0
    %153 = vperm.xlu0 %152, %v135
    %v154 = vpop.permute.xlu0 %153
    %v156 = vmul.f32 %v28, %v139
    %v157 = vmul.f32 %v29, %v139
    %v158 = vmul.f32 %v30, %v144
    %v159 = vmul.f32 %v31, %v144
    %v160 = vmul.f32 %v32, %v149
    %v161 = vmul.f32 %v33, %v149
    %v162 = vmul.f32 %v34, %v154
    %v163 = vmul.f32 %v35, %v154
    %164 = vst [vmem:[#allocation7] sm:$0xff] %v156
    %165 = vst [vmem:[#allocation7 + $0x8] sm:$0xff] %v157
    %166 = vst [vmem:[#allocation7 + $0x10] sm:$0xff] %v158
    %167 = vst [vmem:[#allocation7 + $0x18] sm:$0xff] %v159
    %168 = vst [vmem:[#allocation7 + $0x20] sm:$0xff] %v160
    %169 = vst [vmem:[#allocation7 + $0x28] sm:$0xff] %v161
    %170 = vst [vmem:[#allocation7 + $0x30] sm:$0xff] %v162
    %171 = vst [vmem:[#allocation7 + $0x38] sm:$0xff] %v163
    // Predicated region
    $region10: #{tpu_custom_call.1} parent=1 // pred_check
      _
    $region11: #{tpu_custom_call.1} parent=1 // pred_check_branch
      %173 = sbr.rel (0) target = $region13
    $region12: #{tpu_custom_call.1} parent=1 // pred_region
      %s175 = ssub.s32 1024, 1024
      %176 = vsyncadd [#allocation6], %s175
      %s177 = sshll.u32 [#allocation7], 4
      %s178 = int_to_ptr.vmem [resolvable:$true] %s177
      %183 = dma.vmem_to_hbm [thread:$0]  %s178, 1024, %s2, [#allocation6], 256, 256, 16
    $region13: #{tpu_custom_call.1} parent=1 // pred_fallthru
      _
    // Predicated region
    $region14: #{tpu_custom_call.1} parent=1 // pred_check
      _
    $region15: #{tpu_custom_call.1} parent=1 // pred_check_branch
      %185 = sbr.rel (0) target = $region17
    $region16: #{tpu_custom_call.1} parent=1 // pred_region
      %186 = dma.done [#allocation6], 1024
    $region17: #{tpu_custom_call.1} parent=1 // pred_fallthru
      _
    %187 = vsyncpa [#allocation5], 1
    %188 = vsyncpa [#allocation6], 1

</llo_original>
